<compile_context>
chip_gen: v6e
topology: v6e:2x2x1
jax: 0.10.0
libtpu: 0.0.40
codegen_flags: <defaults>
</compile_context>

<pallas_src>
import functools

import numpy as np
import jax
import jax.numpy as jnp
from jax import lax
from jax.experimental import pallas as pl
from jax.experimental.pallas import tpu as pltpu

QUANTILES = (0.25, 0.75)   # LossIQR.quantiles buffer
WEIGHTS = (-1.5, 2.5)      # LossIQR.weights buffer
_LANES = 128
_MAX_FINITE_F32_BITS = 0x7F7FFFFF


def _round_up(x, m):
    return ((x + m - 1) // m) * m


def _iqr_loss_kernel(o_hbm, t_hbm, out_ref, loss_ref, obuf, tbuf, copy_sem,
                     *, n, order_ks, fracs, weights):
    rows, lanes = loss_ref.shape          # static; rows % tile_r == 0
    tile_r = obuf.shape[1]
    n_tiles = rows // tile_r
    padded = rows * lanes != n

    # ---------------- Phase 1: double-buffered streaming -> loss slab --------
    def fetch(i, slot):
        r0 = i * tile_r
        pltpu.make_async_copy(o_hbm.at[pl.ds(r0, tile_r), :], obuf.at[slot],
                              copy_sem.at[0, slot]).start()
        pltpu.make_async_copy(t_hbm.at[pl.ds(r0, tile_r), :], tbuf.at[slot],
                              copy_sem.at[1, slot]).start()

    fetch(0, 0)                           # prime slot 0

    @pl.loop(0, n_tiles)
    def _(i):
        slot = i & 1
        r0 = pl.multiple_of(i * tile_r, tile_r)
        pltpu.make_async_copy(o_hbm.at[pl.ds(0, tile_r), :], obuf.at[slot],
                              copy_sem.at[0, slot]).wait()
        pltpu.make_async_copy(t_hbm.at[pl.ds(0, tile_r), :], tbuf.at[slot],
                              copy_sem.at[1, slot]).wait()

        @pl.when(i + 1 < n_tiles)
        def _():
            fetch(i + 1, 1 - slot)        # prefetch next tile into other slot

        d = obuf[slot] - tbuf[slot]
        l = d * d
        if padded:
            # In-kernel tail masking: padded flat positions become +inf so the
            # quantile search and the `loss < thresh` mask never select them.
            flat = (r0 * lanes
                    + lax.broadcasted_iota(jnp.int32, (tile_r, lanes), 0) * lanes
                    + lax.broadcasted_iota(jnp.int32, (tile_r, lanes), 1))
            l = jnp.where(flat < n, l, jnp.inf)
        loss_ref[pl.ds(r0, tile_r), :] = l

    # Squared errors are >= 0, so their f32 bit patterns are order-preserving
    # as int32: the k-th order statistic is found by binary search over bits.
    ones8 = jnp.ones((8, rows), jnp.float32)  # hoisted MXU count LHS

    def count_f32(mask):
        # Sublane count-reduction on the (otherwise idle) MXU, lane reduction
        # on the XLU.  Exact for counts <= 2**24, which covers any loss slab
        # that fits in VMEM.
        per_lane = jnp.dot(ones8, mask.astype(jnp.float32),
                           preferred_element_type=jnp.float32)   # (8, 128)
        return jnp.sum(per_lane[0:1, :])

    # ---------------- Phase 2: fused binary search for both ranks ------------
    k25 = order_ks[0][0]
    k75 = order_ks[1][0]

    def search_body(_, carry):
        lo_a, hi_a, lo_b, hi_b = carry
        mid_a = lo_a + ((hi_a - lo_a) >> 1)
        mid_b = lo_b + ((hi_b - lo_b) >> 1)
        bits = pltpu.bitcast(loss_ref[...], jnp.int32)  # one pass serves both
        cnt_a = count_f32(bits <= mid_a)
        cnt_b = count_f32(bits <= mid_b)
        f_a = cnt_a >= jnp.float32(k25 + 1)
        f_b = cnt_b >= jnp.float32(k75 + 1)
        return (jnp.where(f_a, lo_a, mid_a + 1), jnp.where(f_a, mid_a, hi_a),
                jnp.where(f_b, lo_b, mid_b + 1), jnp.where(f_b, mid_b, hi_b))

    init = (jnp.int32(0), jnp.int32(_MAX_FINITE_F32_BITS),
            jnp.int32(0), jnp.int32(_MAX_FINITE_F32_BITS))
    # 31 steps suffice: the positive-finite f32 bit space is < 2**31 wide.
    lo25, _, lo75, _ = lax.fori_loop(0, 31, search_body, init)

    # ---------------- Phase 3: torch 'linear' interpolation (one pass) -------
    loss_all = loss_ref[...]                       # single load shared by both
    bits_all = pltpu.bitcast(loss_all, jnp.int32)  # bitcast of the same value

    def quantile_value(lo_bits_scalar, ks, frac):
        k_lo, k_hi = ks
        le = bits_all <= lo_bits_scalar
        s_lo = jnp.max(jnp.where(le, loss_all, -jnp.inf))   # value at rank k_lo
        if frac == 0.0 or k_hi == k_lo:
            return s_lo
        # Rank k_hi == k_lo + 1: equals s_lo when duplicates span that rank,
        # otherwise it is the smallest element strictly greater than s_lo.
        cnt_le = count_f32(le)
        s_gt = jnp.min(jnp.where(le, jnp.inf, loss_all))
        s_hi = jnp.where(cnt_le >= jnp.float32(k_hi + 1), s_lo, s_gt)
        return s_lo + jnp.float32(frac) * (s_hi - s_lo)

    q25 = quantile_value(lo25, order_ks[0], fracs[0])
    q75 = quantile_value(lo75, order_ks[1], fracs[1])
    thresh = jnp.float32(weights[0]) * q25 + jnp.float32(weights[1]) * q75

    # ---------------- Phase 4: masked mean ------------------------------------
    loss = loss_ref[...]
    mask = loss < thresh                         # padded +inf is never selected
    masked_sum = jnp.sum(jnp.where(mask, loss, jnp.float32(0.0)))
    masked_cnt = count_f32(mask)
    # TODO(synk): progress_tracker (mask.sum()/numel appended to a Python list)
    # is host-side stateful bookkeeping in the torch module; not an output here.
    out_ref[...] = jnp.full((1, 1), masked_sum / masked_cnt, jnp.float32)


def loss_iqr(outputs, targets):
    assert outputs.shape == targets.shape
    n = int(np.prod(outputs.shape))
    assert n >= 1

    rows = pl.cdiv(n, _LANES)
    # Streaming tile for phase 1: full (8, 128) tiles only.
    tile_r = _round_up(rows, 8) if rows <= 512 else 512
    rows_p = _round_up(rows, tile_r)
    total = rows_p * _LANES

    o = jnp.asarray(outputs, jnp.float32).reshape(-1)
    t = jnp.asarray(targets, jnp.float32).reshape(-1)
    pad = total - n
    if pad:
        # Cheap zero pad (no +/-inf construction on the host); the kernel
        # masks flat positions >= n to +inf itself.
        o = jnp.pad(o, (0, pad))
        t = jnp.pad(t, (0, pad))
    o2 = o.reshape(rows_p, _LANES)
    t2 = t.reshape(rows_p, _LANES)

    # Static order-statistic ranks + interpolation fractions (torch 'linear').
    order_ks, fracs = [], []
    for q in QUANTILES:
        p = q * (n - 1)
        k_lo = int(np.floor(p))
        k_hi = min(k_lo + 1, n - 1)
        order_ks.append((k_lo, k_hi))
        fracs.append(float(p - k_lo))

    kernel = functools.partial(
        _iqr_loss_kernel, n=n, order_ks=tuple(order_ks), fracs=tuple(fracs),
        weights=WEIGHTS)

    loss_bytes = rows_p * _LANES * 4
    tile_bytes = tile_r * _LANES * 4
    # Size the scoped VMEM limit explicitly: loss slab + 2x2 streaming tiles +
    # headroom (defaults are 16/32 MiB on v5e/v6e).  The whole-slab-in-VMEM
    # design caps near ~14M elements on v7x (64 MiB physical VMEM).
    # TODO(synk): for larger tensors, re-stream the loss from HBM per binary-
    # search step instead of keeping it resident.
    vmem_limit = min(loss_bytes + 4 * tile_bytes + (16 << 20), 64 << 20)

    out = pl.pallas_call(
        kernel,
        out_shape=jax.ShapeDtypeStruct((1, 1), jnp.float32),
        in_specs=[
            pl.BlockSpec(memory_space=pl.ANY),   # outputs stay in HBM
            pl.BlockSpec(memory_space=pl.ANY),   # targets stay in HBM
        ],
        out_specs=pl.BlockSpec(memory_space=pltpu.MemorySpace.VMEM),
        scratch_shapes=[
            pltpu.VMEM((rows_p, _LANES), jnp.float32),    # loss slab (only full-size resident buffer)
            pltpu.VMEM((2, tile_r, _LANES), jnp.float32), # outputs double-buffer
            pltpu.VMEM((2, tile_r, _LANES), jnp.float32), # targets double-buffer
            pltpu.SemaphoreType.DMA((2, 2)),
        ],
        compiler_params=pltpu.CompilerParams(vmem_limit_bytes=vmem_limit),
    )(o2, t2)
    return out[0, 0]


if __name__ == "__main__":
    key = jax.random.PRNGKey(0)
    k1, k2 = jax.random.split(key)
    shape = (2, 4, 16, 16)  # NCHW, 2048 elements
    outputs = jax.random.normal(k1, shape, jnp.float32)
    targets = jax.random.normal(k2, shape, jnp.float32)

    result = jax.block_until_ready(loss_iqr(outputs, targets))

    # Pure-numpy reference (same as the torch module with MSE reduction='none').
    loss_np = np.asarray((outputs - targets) ** 2, dtype=np.float64).reshape(-1)
    q = np.quantile(loss_np, np.array(QUANTILES))
    thresh = float((q * np.array(WEIGHTS)).sum())
    ref = loss_np[loss_np < thresh].mean()

    np.testing.assert_allclose(np.asarray(result), ref, rtol=1e-3, atol=1e-6)
    print("KERNEL_OK")
</pallas_src>

<mosaic_0001>
module attributes {stable_mosaic.version = 11 : i64} {
  func.func @_iqr_loss_kernel(%arg0: memref<16x128xf32, #tpu.memory_space<any>>, %arg1: memref<16x128xf32, #tpu.memory_space<any>>, %arg2: memref<1x1xf32, #tpu.memory_space<vmem>>, %arg3: memref<16x128xf32, #tpu.memory_space<vmem>>, %arg4: memref<2x16x128xf32, #tpu.memory_space<vmem>>, %arg5: memref<2x16x128xf32, #tpu.memory_space<vmem>>, %arg6: memref<2x2x!tpu.dma_semaphore, #tpu.memory_space<semaphore_mem>>) attributes {dimension_semantics = [], scalar_prefetch = 0 : i64, scratch_operands = 4 : i64, tpu.core_type = #tpu.core_type<tc>} {
    %c0_i32 = arith.constant 0 : i32
    %c0_i32_0 = arith.constant 0 : i32
    %c0_i32_1 = arith.constant 0 : i32
    %c0_i32_2 = arith.constant 0 : i32
    %c0_i32_3 = arith.constant 0 : i32
    %0 = tpu.memref_slice %arg0[%c0_i32_2, %c0_i32_3] : memref<16x128xf32, #tpu.memory_space<any>> -> memref<16x128xf32, #tpu.memory_space<any>>
    %c0_i32_4 = arith.constant 0 : i32
    %c0_i32_5 = arith.constant 0 : i32
    %1 = tpu.memref_slice %arg4[%c0_i32, %c0_i32_4, %c0_i32_5] : memref<2x16x128xf32, #tpu.memory_space<vmem>> -> memref<1x16x128xf32, #tpu.memory_space<vmem>>
    %2 = tpu.memref_squeeze %1 : memref<1x16x128xf32, #tpu.memory_space<vmem>> -> memref<16x128xf32, #tpu.memory_space<vmem>>
    %3 = tpu.memref_slice %arg6[%c0_i32_0, %c0_i32_1] : memref<2x2x!tpu.dma_semaphore, #tpu.memory_space<semaphore_mem>> -> memref<1x1x!tpu.dma_semaphore, #tpu.memory_space<semaphore_mem>>
    %4 = tpu.memref_squeeze %3 : memref<1x1x!tpu.dma_semaphore, #tpu.memory_space<semaphore_mem>> -> memref<!tpu.dma_semaphore, #tpu.memory_space<semaphore_mem>>
    tpu.enqueue_dma source(%0 : memref<16x128xf32, #tpu.memory_space<any>>) target(%2 : memref<16x128xf32, #tpu.memory_space<vmem>>) target_semaphore(%4 : memref<!tpu.dma_semaphore, #tpu.memory_space<semaphore_mem>>)
    %c0_i32_6 = arith.constant 0 : i32
    %c1_i32 = arith.constant 1 : i32
    %c0_i32_7 = arith.constant 0 : i32
    %c0_i32_8 = arith.constant 0 : i32
    %c0_i32_9 = arith.constant 0 : i32
    %5 = tpu.memref_slice %arg1[%c0_i32_8, %c0_i32_9] : memref<16x128xf32, #tpu.memory_space<any>> -> memref<16x128xf32, #tpu.memory_space<any>>
    %c0_i32_10 = arith.constant 0 : i32
    %c0_i32_11 = arith.constant 0 : i32
    %6 = tpu.memref_slice %arg5[%c0_i32_6, %c0_i32_10, %c0_i32_11] : memref<2x16x128xf32, #tpu.memory_space<vmem>> -> memref<1x16x128xf32, #tpu.memory_space<vmem>>
    %7 = tpu.memref_squeeze %6 : memref<1x16x128xf32, #tpu.memory_space<vmem>> -> memref<16x128xf32, #tpu.memory_space<vmem>>
    %8 = tpu.memref_slice %arg6[%c1_i32, %c0_i32_7] : memref<2x2x!tpu.dma_semaphore, #tpu.memory_space<semaphore_mem>> -> memref<1x1x!tpu.dma_semaphore, #tpu.memory_space<semaphore_mem>>
    %9 = tpu.memref_squeeze %8 : memref<1x1x!tpu.dma_semaphore, #tpu.memory_space<semaphore_mem>> -> memref<!tpu.dma_semaphore, #tpu.memory_space<semaphore_mem>>
    tpu.enqueue_dma source(%5 : memref<16x128xf32, #tpu.memory_space<any>>) target(%7 : memref<16x128xf32, #tpu.memory_space<vmem>>) target_semaphore(%9 : memref<!tpu.dma_semaphore, #tpu.memory_space<semaphore_mem>>)
    %c0_i32_12 = arith.constant 0 : i32
    %c1_i32_13 = arith.constant 1 : i32
    %10 = arith.muli %c0_i32_12, %c1_i32_13 : i32
    %c0_i32_14 = arith.constant 0 : i32
    %11 = arith.addi %c0_i32_14, %10 : i32
    %c1_i32_15 = arith.constant 1 : i32
    %12 = arith.andi %11, %c1_i32_15 : i32
    %c16_i32 = arith.constant 16 : i32
    %13 = arith.muli %11, %c16_i32 : i32
    %14 = tpu.assume_multiple %13, 16 : i32
    %c0_i32_16 = arith.constant 0 : i32
    %c0_i32_17 = arith.constant 0 : i32
    %c0_i32_18 = arith.constant 0 : i32
    %15 = tpu.memref_slice %arg0[%c0_i32_17, %c0_i32_18] : memref<16x128xf32, #tpu.memory_space<any>> -> memref<16x128xf32, #tpu.memory_space<any>>
    %c0_i32_19 = arith.constant 0 : i32
    %c0_i32_20 = arith.constant 0 : i32
    %16 = tpu.memref_slice %arg4[%12, %c0_i32_19, %c0_i32_20] : memref<2x16x128xf32, #tpu.memory_space<vmem>> -> memref<1x16x128xf32, #tpu.memory_space<vmem>>
    %17 = tpu.memref_squeeze %16 : memref<1x16x128xf32, #tpu.memory_space<vmem>> -> memref<16x128xf32, #tpu.memory_space<vmem>>
    %18 = tpu.memref_slice %arg6[%c0_i32_16, %12] : memref<2x2x!tpu.dma_semaphore, #tpu.memory_space<semaphore_mem>> -> memref<1x1x!tpu.dma_semaphore, #tpu.memory_space<semaphore_mem>>
    %19 = tpu.memref_squeeze %18 : memref<1x1x!tpu.dma_semaphore, #tpu.memory_space<semaphore_mem>> -> memref<!tpu.dma_semaphore, #tpu.memory_space<semaphore_mem>>
    tpu.wait_dma2 semaphore(%19 : memref<!tpu.dma_semaphore, #tpu.memory_space<semaphore_mem>>) src(%15 : memref<16x128xf32, #tpu.memory_space<any>>) dst(%17 : memref<16x128xf32, #tpu.memory_space<vmem>>)
    %c1_i32_21 = arith.constant 1 : i32
    %c0_i32_22 = arith.constant 0 : i32
    %c0_i32_23 = arith.constant 0 : i32
    %20 = tpu.memref_slice %arg1[%c0_i32_22, %c0_i32_23] : memref<16x128xf32, #tpu.memory_space<any>> -> memref<16x128xf32, #tpu.memory_space<any>>
    %c0_i32_24 = arith.constant 0 : i32
    %c0_i32_25 = arith.constant 0 : i32
    %21 = tpu.memref_slice %arg5[%12, %c0_i32_24, %c0_i32_25] : memref<2x16x128xf32, #tpu.memory_space<vmem>> -> memref<1x16x128xf32, #tpu.memory_space<vmem>>
    %22 = tpu.memref_squeeze %21 : memref<1x16x128xf32, #tpu.memory_space<vmem>> -> memref<16x128xf32, #tpu.memory_space<vmem>>
    %23 = tpu.memref_slice %arg6[%c1_i32_21, %12] : memref<2x2x!tpu.dma_semaphore, #tpu.memory_space<semaphore_mem>> -> memref<1x1x!tpu.dma_semaphore, #tpu.memory_space<semaphore_mem>>
    %24 = tpu.memref_squeeze %23 : memref<1x1x!tpu.dma_semaphore, #tpu.memory_space<semaphore_mem>> -> memref<!tpu.dma_semaphore, #tpu.memory_space<semaphore_mem>>
    tpu.wait_dma2 semaphore(%24 : memref<!tpu.dma_semaphore, #tpu.memory_space<semaphore_mem>>) src(%20 : memref<16x128xf32, #tpu.memory_space<any>>) dst(%22 : memref<16x128xf32, #tpu.memory_space<vmem>>)
    %c1_i32_26 = arith.constant 1 : i32
    %25 = arith.addi %11, %c1_i32_26 : i32
    %c1_i32_27 = arith.constant 1 : i32
    %26 = arith.cmpi slt, %25, %c1_i32_27 : i32
    %27 = arith.extui %26 : i1 to i32
    %c0_i32_28 = arith.constant 0 : i32
    %28 = arith.cmpi ne, %27, %c0_i32_28 : i32
    scf.if %28 {
      %c1_i32_67 = arith.constant 1 : i32
      %121 = arith.addi %11, %c1_i32_67 : i32
      %c1_i32_68 = arith.constant 1 : i32
      %122 = arith.subi %c1_i32_68, %12 : i32
      %c16_i32_69 = arith.constant 16 : i32
      %123 = arith.muli %121, %c16_i32_69 : i32
      %c0_i32_70 = arith.constant 0 : i32
      %c0_i32_71 = arith.constant 0 : i32
      %124 = tpu.memref_slice %arg0[%123, %c0_i32_71] : memref<16x128xf32, #tpu.memory_space<any>> -> memref<16x128xf32, #tpu.memory_space<any>>
      %c0_i32_72 = arith.constant 0 : i32
      %c0_i32_73 = arith.constant 0 : i32
      %125 = tpu.memref_slice %arg4[%122, %c0_i32_72, %c0_i32_73] : memref<2x16x128xf32, #tpu.memory_space<vmem>> -> memref<1x16x128xf32, #tpu.memory_space<vmem>>
      %126 = tpu.memref_squeeze %125 : memref<1x16x128xf32, #tpu.memory_space<vmem>> -> memref<16x128xf32, #tpu.memory_space<vmem>>
      %127 = tpu.memref_slice %arg6[%c0_i32_70, %122] : memref<2x2x!tpu.dma_semaphore, #tpu.memory_space<semaphore_mem>> -> memref<1x1x!tpu.dma_semaphore, #tpu.memory_space<semaphore_mem>>
      %128 = tpu.memref_squeeze %127 : memref<1x1x!tpu.dma_semaphore, #tpu.memory_space<semaphore_mem>> -> memref<!tpu.dma_semaphore, #tpu.memory_space<semaphore_mem>>
      tpu.enqueue_dma source(%124 : memref<16x128xf32, #tpu.memory_space<any>>) target(%126 : memref<16x128xf32, #tpu.memory_space<vmem>>) target_semaphore(%128 : memref<!tpu.dma_semaphore, #tpu.memory_space<semaphore_mem>>)
      %c1_i32_74 = arith.constant 1 : i32
      %c0_i32_75 = arith.constant 0 : i32
      %129 = tpu.memref_slice %arg1[%123, %c0_i32_75] : memref<16x128xf32, #tpu.memory_space<any>> -> memref<16x128xf32, #tpu.memory_space<any>>
      %c0_i32_76 = arith.constant 0 : i32
      %c0_i32_77 = arith.constant 0 : i32
      %130 = tpu.memref_slice %arg5[%122, %c0_i32_76, %c0_i32_77] : memref<2x16x128xf32, #tpu.memory_space<vmem>> -> memref<1x16x128xf32, #tpu.memory_space<vmem>>
      %131 = tpu.memref_squeeze %130 : memref<1x16x128xf32, #tpu.memory_space<vmem>> -> memref<16x128xf32, #tpu.memory_space<vmem>>
      %132 = tpu.memref_slice %arg6[%c1_i32_74, %122] : memref<2x2x!tpu.dma_semaphore, #tpu.memory_space<semaphore_mem>> -> memref<1x1x!tpu.dma_semaphore, #tpu.memory_space<semaphore_mem>>
      %133 = tpu.memref_squeeze %132 : memref<1x1x!tpu.dma_semaphore, #tpu.memory_space<semaphore_mem>> -> memref<!tpu.dma_semaphore, #tpu.memory_space<semaphore_mem>>
      tpu.enqueue_dma source(%129 : memref<16x128xf32, #tpu.memory_space<any>>) target(%131 : memref<16x128xf32, #tpu.memory_space<vmem>>) target_semaphore(%133 : memref<!tpu.dma_semaphore, #tpu.memory_space<semaphore_mem>>)
    } else {
    }
    %29 = arith.index_cast %12 : i32 to index
    %c0 = arith.constant 0 : index
    %c0_29 = arith.constant 0 : index
    %30 = vector.load %arg4[%29, %c0, %c0_29] : memref<2x16x128xf32, #tpu.memory_space<vmem>>, vector<1x16x128xf32>
    %31 = vector.shape_cast %30 : vector<1x16x128xf32> to vector<16x128xf32>
    %32 = arith.index_cast %12 : i32 to index
    %c0_30 = arith.constant 0 : index
    %c0_31 = arith.constant 0 : index
    %33 = vector.load %arg5[%32, %c0_30, %c0_31] : memref<2x16x128xf32, #tpu.memory_space<vmem>>, vector<1x16x128xf32>
    %34 = vector.shape_cast %33 : vector<1x16x128xf32> to vector<16x128xf32>
    %35 = arith.subf %31, %34 : vector<16x128xf32>
    %36 = arith.mulf %35, %35 : vector<16x128xf32>
    %37 = arith.index_cast %14 : i32 to index
    %c0_32 = arith.constant 0 : index
    %38 = vector.load %arg3[%37, %c0_32] : memref<16x128xf32, #tpu.memory_space<vmem>>, vector<16x128xf32>
    tpu.vector_store %arg3[%37, %c0_32], %36 {strides = array<i32>} : memref<16x128xf32, #tpu.memory_space<vmem>>, vector<16x128xf32>,
    %c1_i32_33 = arith.constant 1 : i32
    %cst = arith.constant 1.000000e+00 : f32
    %39 = vector.broadcast %cst : f32 to vector<8x16xf32>
    %c0_i32_34 = arith.constant 0 : i32
    %c2139095039_i32 = arith.constant 2139095039 : i32
    %c0_i32_35 = arith.constant 0 : i32
    %c2139095039_i32_36 = arith.constant 2139095039 : i32
    %c0_i32_37 = arith.constant 0 : i32
    %c31_i32 = arith.constant 31 : i32
    %40 = arith.addi %c0_i32_37, %c31_i32 : i32
    %c1_i32_38 = arith.constant 1 : i32
    %41:4 = scf.for %arg7 = %c0_i32_37 to %40 step %c1_i32_38 iter_args(%arg8 = %c0_i32_34, %arg9 = %c2139095039_i32, %arg10 = %c0_i32_35, %arg11 = %c2139095039_i32_36) -> (i32, i32, i32, i32)  : i32 {
      %121 = arith.subi %arg9, %arg8 : i32
      %c1_i32_67 = arith.constant 1 : i32
      %122 = arith.shrsi %121, %c1_i32_67 : i32
      %123 = arith.addi %arg8, %122 : i32
      %124 = arith.subi %arg11, %arg10 : i32
      %c1_i32_68 = arith.constant 1 : i32
      %125 = arith.shrsi %124, %c1_i32_68 : i32
      %126 = arith.addi %arg10, %125 : i32
      %c0_69 = arith.constant 0 : index
      %c0_70 = arith.constant 0 : index
      %127 = vector.load %arg3[%c0_69, %c0_70] : memref<16x128xf32, #tpu.memory_space<vmem>>, vector<16x128xf32>
      %128 = tpu.bitcast %127 : vector<16x128xf32> -> vector<16x128xi32>
      %129 = vector.broadcast %123 : i32 to vector<16x128xi32>
      %130 = arith.cmpi sle, %128, %129 : vector<16x128xi32>
      %131 = arith.extui %130 : vector<16x128xi1> to vector<16x128xi32>
      %132 = arith.sitofp %131 : vector<16x128xi32> to vector<16x128xf32>
      %cst_71 = arith.constant dense<0.000000e+00> : vector<8x128xf32>
      %133 = tpu.matmul %39, %132, %cst_71 {dimension_numbers = #tpu.dot_dimension_numbers<[1], [0], [0], [1], [0, 0, 1, 1], [], []>} : vector<8x16xf32>, vector<16x128xf32>, vector<8x128xf32> -> vector<8x128xf32>
      %134 = vector.extract_strided_slice %133 {offsets = [0, 0], sizes = [1, 128], strides = [1, 1]} : vector<8x128xf32> to vector<1x128xf32>
      %135 = vector.shape_cast %134 : vector<1x128xf32> to vector<1x1x128xf32>
      %cst_72 = arith.constant dense<0.000000e+00> : vector<1xf32>
      %136 = vector.multi_reduction <add>, %135, %cst_72 [1, 2] : vector<1x1x128xf32> to vector<1xf32>
      %137 = vector.shape_cast %136 : vector<1xf32> to vector<1x1x1xf32>
      %138 = vector.extract %137[0, 0, 0] : f32 from vector<1x1x1xf32>
      %139 = vector.broadcast %126 : i32 to vector<16x128xi32>
      %140 = arith.cmpi sle, %128, %139 : vector<16x128xi32>
      %141 = arith.extui %140 : vector<16x128xi1> to vector<16x128xi32>
      %142 = arith.sitofp %141 : vector<16x128xi32> to vector<16x128xf32>
      %cst_73 = arith.constant dense<0.000000e+00> : vector<8x128xf32>
      %143 = tpu.matmul %39, %142, %cst_73 {dimension_numbers = #tpu.dot_dimension_numbers<[1], [0], [0], [1], [0, 0, 1, 1], [], []>} : vector<8x16xf32>, vector<16x128xf32>, vector<8x128xf32> -> vector<8x128xf32>
      %144 = vector.extract_strided_slice %143 {offsets = [0, 0], sizes = [1, 128], strides = [1, 1]} : vector<8x128xf32> to vector<1x128xf32>
      %145 = vector.shape_cast %144 : vector<1x128xf32> to vector<1x1x128xf32>
      %cst_74 = arith.constant dense<0.000000e+00> : vector<1xf32>
      %146 = vector.multi_reduction <add>, %145, %cst_74 [1, 2] : vector<1x1x128xf32> to vector<1xf32>
      %147 = vector.shape_cast %146 : vector<1xf32> to vector<1x1x1xf32>
      %148 = vector.extract %147[0, 0, 0] : f32 from vector<1x1x1xf32>
      %cst_75 = arith.constant 5.120000e+02 : f32
      %149 = arith.cmpf oge, %138, %cst_75 : f32
      %cst_76 = arith.constant 1.536000e+03 : f32
      %150 = arith.cmpf oge, %148, %cst_76 : f32
      %c1_i32_77 = arith.constant 1 : i32
      %151 = arith.addi %123, %c1_i32_77 : i32
      %152 = arith.select %149, %arg8, %151 : i32
      %153 = arith.select %149, %123, %arg9 : i32
      %c1_i32_78 = arith.constant 1 : i32
      %154 = arith.addi %126, %c1_i32_78 : i32
      %155 = arith.select %150, %arg10, %154 : i32
      %156 = arith.select %150, %126, %arg11 : i32
      scf.yield %152, %153, %155, %156 : i32, i32, i32, i32
    }
    %c0_39 = arith.constant 0 : index
    %c0_40 = arith.constant 0 : index
    %42 = vector.load %arg3[%c0_39, %c0_40] : memref<16x128xf32, #tpu.memory_space<vmem>>, vector<16x128xf32>
    %43 = tpu.bitcast %42 : vector<16x128xf32> -> vector<16x128xi32>
    %44 = vector.broadcast %41#0 : i32 to vector<16x128xi32>
    %45 = arith.cmpi sle, %43, %44 : vector<16x128xi32>
    %cst_41 = arith.constant 0xFF800000 : f32
    %46 = vector.broadcast %cst_41 : f32 to vector<16x128xf32>
    %47 = arith.select %45, %42, %46 : vector<16x128xi1>, vector<16x128xf32>
    %48 = vector.shape_cast %47 : vector<16x128xf32> to vector<1x16x128xf32>
    %cst_42 = arith.constant dense<0xFF800000> : vector<1xf32>
    %49 = vector.multi_reduction <maximumf>, %48, %cst_42 [1, 2] : vector<1x16x128xf32> to vector<1xf32>
    %50 = vector.shape_cast %49 : vector<1xf32> to vector<1x1x1xf32>
    %51 = vector.extract %50[0, 0, 0] : f32 from vector<1x1x1xf32>
    %52 = arith.extui %45 : vector<16x128xi1> to vector<16x128xi32>
    %53 = arith.sitofp %52 : vector<16x128xi32> to vector<16x128xf32>
    %cst_43 = arith.constant dense<0.000000e+00> : vector<8x128xf32>
    %54 = tpu.matmul %39, %53, %cst_43 {dimension_numbers = #tpu.dot_dimension_numbers<[1], [0], [0], [1], [0, 0, 1, 1], [], []>} : vector<8x16xf32>, vector<16x128xf32>, vector<8x128xf32> -> vector<8x128xf32>
    %55 = vector.extract_strided_slice %54 {offsets = [0, 0], sizes = [1, 128], strides = [1, 1]} : vector<8x128xf32> to vector<1x128xf32>
    %56 = vector.shape_cast %55 : vector<1x128xf32> to vector<1x1x128xf32>
    %cst_44 = arith.constant dense<0.000000e+00> : vector<1xf32>
    %57 = vector.multi_reduction <add>, %56, %cst_44 [1, 2] : vector<1x1x128xf32> to vector<1xf32>
    %58 = vector.shape_cast %57 : vector<1xf32> to vector<1x1x1xf32>
    %59 = vector.extract %58[0, 0, 0] : f32 from vector<1x1x1xf32>
    %cst_45 = arith.constant 0x7F800000 : f32
    %60 = vector.broadcast %cst_45 : f32 to vector<16x128xf32>
    %61 = arith.select %45, %60, %42 : vector<16x128xi1>, vector<16x128xf32>
    %62 = vector.shape_cast %61 : vector<16x128xf32> to vector<1x16x128xf32>
    %cst_46 = arith.constant dense<0x7F800000> : vector<1xf32>
    %63 = vector.multi_reduction <minimumf>, %62, %cst_46 [1, 2] : vector<1x16x128xf32> to vector<1xf32>
    %64 = vector.shape_cast %63 : vector<1xf32> to vector<1x1x1xf32>
    %65 = vector.extract %64[0, 0, 0] : f32 from vector<1x1x1xf32>
    %cst_47 = arith.constant 5.130000e+02 : f32
    %66 = arith.cmpf oge, %59, %cst_47 : f32
    %67 = arith.select %66, %51, %65 : f32
    %68 = arith.subf %67, %51 : f32
    %cst_48 = arith.constant 7.500000e-01 : f32
    %69 = arith.mulf %cst_48, %68 : f32
    %70 = arith.addf %51, %69 : f32
    %71 = vector.broadcast %41#2 : i32 to vector<16x128xi32>
    %72 = arith.cmpi sle, %43, %71 : vector<16x128xi32>
    %cst_49 = arith.constant 0xFF800000 : f32
    %73 = vector.broadcast %cst_49 : f32 to vector<16x128xf32>
    %74 = arith.select %72, %42, %73 : vector<16x128xi1>, vector<16x128xf32>
    %75 = vector.shape_cast %74 : vector<16x128xf32> to vector<1x16x128xf32>
    %cst_50 = arith.constant dense<0xFF800000> : vector<1xf32>
    %76 = vector.multi_reduction <maximumf>, %75, %cst_50 [1, 2] : vector<1x16x128xf32> to vector<1xf32>
    %77 = vector.shape_cast %76 : vector<1xf32> to vector<1x1x1xf32>
    %78 = vector.extract %77[0, 0, 0] : f32 from vector<1x1x1xf32>
    %79 = arith.extui %72 : vector<16x128xi1> to vector<16x128xi32>
    %80 = arith.sitofp %79 : vector<16x128xi32> to vector<16x128xf32>
    %cst_51 = arith.constant dense<0.000000e+00> : vector<8x128xf32>
    %81 = tpu.matmul %39, %80, %cst_51 {dimension_numbers = #tpu.dot_dimension_numbers<[1], [0], [0], [1], [0, 0, 1, 1], [], []>} : vector<8x16xf32>, vector<16x128xf32>, vector<8x128xf32> -> vector<8x128xf32>
    %82 = vector.extract_strided_slice %81 {offsets = [0, 0], sizes = [1, 128], strides = [1, 1]} : vector<8x128xf32> to vector<1x128xf32>
    %83 = vector.shape_cast %82 : vector<1x128xf32> to vector<1x1x128xf32>
    %cst_52 = arith.constant dense<0.000000e+00> : vector<1xf32>
    %84 = vector.multi_reduction <add>, %83, %cst_52 [1, 2] : vector<1x1x128xf32> to vector<1xf32>
    %85 = vector.shape_cast %84 : vector<1xf32> to vector<1x1x1xf32>
    %86 = vector.extract %85[0, 0, 0] : f32 from vector<1x1x1xf32>
    %cst_53 = arith.constant 0x7F800000 : f32
    %87 = vector.broadcast %cst_53 : f32 to vector<16x128xf32>
    %88 = arith.select %72, %87, %42 : vector<16x128xi1>, vector<16x128xf32>
    %89 = vector.shape_cast %88 : vector<16x128xf32> to vector<1x16x128xf32>
    %cst_54 = arith.constant dense<0x7F800000> : vector<1xf32>
    %90 = vector.multi_reduction <minimumf>, %89, %cst_54 [1, 2] : vector<1x16x128xf32> to vector<1xf32>
    %91 = vector.shape_cast %90 : vector<1xf32> to vector<1x1x1xf32>
    %92 = vector.extract %91[0, 0, 0] : f32 from vector<1x1x1xf32>
    %cst_55 = arith.constant 1.537000e+03 : f32
    %93 = arith.cmpf oge, %86, %cst_55 : f32
    %94 = arith.select %93, %78, %92 : f32
    %95 = arith.subf %94, %78 : f32
    %cst_56 = arith.constant 2.500000e-01 : f32
    %96 = arith.mulf %cst_56, %95 : f32
    %97 = arith.addf %78, %96 : f32
    %cst_57 = arith.constant -1.500000e+00 : f32
    %98 = arith.mulf %cst_57, %70 : f32
    %cst_58 = arith.constant 2.500000e+00 : f32
    %99 = arith.mulf %cst_58, %97 : f32
    %100 = arith.addf %98, %99 : f32
    %c0_59 = arith.constant 0 : index
    %c0_60 = arith.constant 0 : index
    %101 = vector.load %arg3[%c0_59, %c0_60] : memref<16x128xf32, #tpu.memory_space<vmem>>, vector<16x128xf32>
    %102 = vector.broadcast %100 : f32 to vector<16x128xf32>
    %103 = arith.cmpf olt, %101, %102 : vector<16x128xf32>
    %cst_61 = arith.constant 0.000000e+00 : f32
    %104 = vector.broadcast %cst_61 : f32 to vector<16x128xf32>
    %105 = arith.select %103, %101, %104 : vector<16x128xi1>, vector<16x128xf32>
    %106 = vector.shape_cast %105 : vector<16x128xf32> to vector<1x16x128xf32>
    %cst_62 = arith.constant dense<0.000000e+00> : vector<1xf32>
    %107 = vector.multi_reduction <add>, %106, %cst_62 [1, 2] : vector<1x16x128xf32> to vector<1xf32>
    %108 = vector.shape_cast %107 : vector<1xf32> to vector<1x1x1xf32>
    %109 = vector.extract %108[0, 0, 0] : f32 from vector<1x1x1xf32>
    %110 = arith.extui %103 : vector<16x128xi1> to vector<16x128xi32>
    %111 = arith.sitofp %110 : vector<16x128xi32> to vector<16x128xf32>
    %cst_63 = arith.constant dense<0.000000e+00> : vector<8x128xf32>
    %112 = tpu.matmul %39, %111, %cst_63 {dimension_numbers = #tpu.dot_dimension_numbers<[1], [0], [0], [1], [0, 0, 1, 1], [], []>} : vector<8x16xf32>, vector<16x128xf32>, vector<8x128xf32> -> vector<8x128xf32>
    %113 = vector.extract_strided_slice %112 {offsets = [0, 0], sizes = [1, 128], strides = [1, 1]} : vector<8x128xf32> to vector<1x128xf32>
    %114 = vector.shape_cast %113 : vector<1x128xf32> to vector<1x1x128xf32>
    %cst_64 = arith.constant dense<0.000000e+00> : vector<1xf32>
    %115 = vector.multi_reduction <add>, %114, %cst_64 [1, 2] : vector<1x1x128xf32> to vector<1xf32>
    %116 = vector.shape_cast %115 : vector<1xf32> to vector<1x1x1xf32>
    %117 = vector.extract %116[0, 0, 0] : f32 from vector<1x1x1xf32>
    %118 = arith.divf %109, %117 : f32
    %119 = vector.broadcast %118 : f32 to vector<1x1xf32>
    %c0_65 = arith.constant 0 : index
    %c0_66 = arith.constant 0 : index
    %120 = vector.load %arg2[%c0_65, %c0_66] : memref<1x1xf32, #tpu.memory_space<vmem>>, vector<1x1xf32>
    tpu.vector_store %arg2[%c0_65, %c0_66], %119 {strides = array<i32>} : memref<1x1xf32, #tpu.memory_space<vmem>>, vector<1x1xf32>,
    return
  }
}

</mosaic_0001>

<llo_original>
// kernel: tpu_custom_call.1
$region0: #{tpu_custom_call.1}
  #allocation0 [shape = 'u32[]', space=smem, size = 0x4, offset = 0x4, fixed_abs, tag = 'smem constant byte address 0x4 - core index']
  #allocation1 [shape = 'u32[144,128]{1,0:T(1,128)}', space=vmem, size = 0x12000, scoped, tag = 'internal scratch']
  #allocation2 [shape = 'f32[16,128]{1,0:T(8,128)}', space=vmem, size = 0x2000, scoped, tag = 'scratch operand']
  #allocation3 [shape = 'f32[2,16,128]{2,1,0:T(8,128)}', space=vmem, size = 0x4000, scoped, tag = 'scratch operand']
  #allocation4 [shape = 'f32[2,16,128]{2,1,0:T(8,128)}', space=vmem, size = 0x4000, scoped, tag = 'scratch operand']
  #allocation5 [shape = 's32[4]{0}', space=sflag, size = 0x10, scoped, tag = 'scratch operand']
  #allocation8 [shape = 's32[]', space=sflag, size = 0x4, offset = 0, fixed_abs, tag = 'sflag constant byte address 0x0 - dummy sync flag']
  #allocation9 [shape = 's32[]', space=sflag, size = 0x4, offset = 0, fixed_abs, tag = 'sflag constant byte address 0x0 - dummy sync flag']
  #allocation10 [shape = 'u32[]', space=smem, size = 0x4, offset = 0x44, fixed_abs, tag = 'smem constant byte address 0x44 - assertion arg 0']
  #allocation11 [shape = 'u32[]', space=smem, size = 0x4, offset = 0x48, fixed_abs, tag = 'smem constant byte address 0x48 - assertion arg 1']
  #allocation12 [shape = 's32[]', space=sflag, size = 0x4, offset = 0, fixed_abs, tag = 'sflag constant byte address 0x0 - dummy sync flag']
  #allocation13 [shape = 's32[]', space=sflag, size = 0x4, offset = 0, fixed_abs, tag = 'sflag constant byte address 0x0 - dummy sync flag']
  %s0 = inlined_call_operand.hbm [shape: f32[16,128], index: 0, kind: input, shape index: {}]
  %s1 = inlined_call_operand.hbm [shape: f32[16,128], index: 1, kind: input, shape index: {}]
  %s2 = inlined_call_operand.hbm [shape: f32[1,1], index: 2, kind: output, shape index: {}]
  %s3 = sld [smem:[#allocation0]]
  $region25: #{tpu_custom_call.1} parent=0
    _
  %s5 = ssub.s32 1, %s3
  %s6 = scalar_select 0, %s5, %s3
  $region1: #{tpu_custom_call.1} parent=0
    #allocation6 [shape = 'u8[512]{0}', space=vmem, size = 0x400, scoped, tag = 'output window, operand 0, single buffered']
    #allocation7 [shape = 's32[1]{0}', space=sflag, size = 0x4, scoped, tag = 'scoped memory for tpu_custom_call.1']
    %7 = vsyncpa [#allocation7], 0
    // Predicated region
    $region2: #{tpu_custom_call.1} parent=1 // pred_check
      _
    $region3: #{tpu_custom_call.1} parent=1 // pred_check_branch
      %9 = sbr.rel target = $region5
    $region4: #{tpu_custom_call.1} parent=1 // pred_region
      %10 = sst [smem:[#allocation10]] [#allocation9]
      %11 = sst [smem:[#allocation11]] [#allocation8]
    $region5: #{tpu_custom_call.1} parent=1 // pred_fallthru
      _
    %13 = shalt.err (0)
    %s15 = sshll.u32 [#allocation3], 4
    %s16 = int_to_ptr.vmem [resolvable:$true] %s15
    %18 = dma.hbm_to_vmem [thread:$0]  %s0, 256, %s16, [#allocation5]
    %s19 = scalar_lea.sflag [#allocation5], 2
    // Predicated region
    $region6: #{tpu_custom_call.1} parent=1 // pred_check
      _
    $region7: #{tpu_custom_call.1} parent=1 // pred_check_branch
      %21 = sbr.rel target = $region9
    $region8: #{tpu_custom_call.1} parent=1 // pred_region
      %22 = sst [smem:[#allocation10]] [#allocation13]
      %23 = sst [smem:[#allocation11]] [#allocation12]
    $region9: #{tpu_custom_call.1} parent=1 // pred_fallthru
      _
    %25 = shalt.err (0)
    %s27 = sshll.u32 [#allocation4], 4
    %s28 = int_to_ptr.vmem [resolvable:$true] %s27
    %30 = dma.hbm_to_vmem [thread:$0]  %s1, 256, %s28, %s19
    %s31 = smul.u32 16, 1
    %s32 = sshll.u32 %s31, 4
    %33 = dma.done [#allocation5], %s32
    %s34 = sshll.u32 %s31, 4
    %35 = dma.done %s19, %s34
    %v36 = vld [vmem:[#allocation3] sm:$0xff]
    %v37 = vld [vmem:[#allocation3 + $0x8] sm:$0xff]
    %v38 = vld [vmem:[#allocation4] sm:$0xff]
    %v39 = vld [vmem:[#allocation4 + $0x8] sm:$0xff]
    %v40 = vsub.f32 %v36, %v38
    %v41 = vsub.f32 %v37, %v39
    %v42 = vmul.f32 %v40, %v40
    %v43 = vmul.f32 %v41, %v41
    %44 = vst [vmem:[#allocation2] sm:$0xff] %v42
    %45 = vst [vmem:[#allocation2 + $0x8] sm:$0xff] %v43
    loop: start=0, step=1, limit=31
    $region10: #{tpu_custom_call.1} parent=1 // loop_pre_header
      _
    $region11: #{tpu_custom_call.1} parent=1 // loop_header
      %s47 = sphi 0, %s51
      %p48 = scmp.ge.s32.totalorder %s47, 31
      %s52 = sphi 0, %s248
      %s53 = sphi 2139095039, %s249
      %s54 = sphi 0, %s251
      %s55 = sphi 2139095039, %s252
    $region12: #{tpu_custom_call.1} parent=1 // loop_header_branch
      %50 = sbr.rel (%p48) target = $region16
    $region13: #{tpu_custom_call.1} parent=1 // loop_body
      %s56 = ssub.s32 %s53, %s52
      %s57 = sshra.s32 %s56, 1
      %s58 = sadd.s32 %s52, %s57
      %s59 = ssub.s32 %s55, %s54
      %s60 = sshra.s32 %s59, 1
      %s61 = sadd.s32 %s54, %s60
      %v62 = vld [vmem:[#allocation2] sm:$0xff]
      %v63 = vld [vmem:[#allocation2 + $0x8] sm:$0xff]
      %v66 = vstv %s58
      %vm67 = vcmp.le.s32.totalorder %v62, %v66
      %vm68 = vcmp.le.s32.totalorder %v63, %v66
      %v69 = vsel %vm67, 1, 0
      %v70 = vsel %vm68, 1, 0
      %v71 = vcvt.s32.f32 %v69
      %v72 = vcvt.s32.f32 %v70
      %vm73 = vcmask 130048
      %v75 = vsel %vm73, 1.0, 0
      %77 = vmatprep.subr.mxu0 0.0
      %78 = vmatpush1.msra.mxu0 0.0
      %79 = vmatprep.subr.mxu0 0.0
      %80 = vmatpush1.msra.mxu0 0.0
      %81 = vmatprep.subr.mxu0 0.0
      %82 = vmatpush1.msra.mxu0 0.0
      %83 = vmatprep.subr.mxu0 0.0
      %84 = vmatpush1.msra.mxu0 0.0
      %85 = vmatprep.subr.mxu0 0.0
      %86 = vmatpush1.msra.mxu0 0.0
      %87 = vmatprep.subr.mxu0 0.0
      %88 = vmatpush1.msra.mxu0 0.0
      %89 = vmatprep.subr.mxu0 0.0
      %90 = vmatpush1.msra.mxu0 0.0
      %91 = vmatprep.subr.mxu0 0.0
      %92 = vmatpush1.msra.mxu0 0.0
      %93 = vmatprep.subr.mxu0 0.0
      %94 = vmatpush1.msra.mxu0 0.0
      %95 = vmatprep.subr.mxu0 0.0
      %96 = vmatpush1.msra.mxu0 0.0
      %97 = vmatprep.subr.mxu0 0.0
      %98 = vmatpush1.msra.mxu0 0.0
      %99 = vmatprep.subr.mxu0 0.0
      %100 = vmatpush1.msra.mxu0 0.0
      %101 = vmatprep.subr.mxu0 0.0
      %102 = vmatpush1.msra.mxu0 0.0
      %103 = vmatprep.subr.mxu0 0.0
      %104 = vmatpush1.msra.mxu0 0.0
      %105 = vmatprep.subr.mxu0 0.0
      %106 = vmatpush1.msra.mxu0 %v72
      %107 = vmatprep.subr.mxu0 0.0
      %108 = vmatpush1.msra.mxu0 %v71
      %109 = vmatprep.subr.mxu0 0.0
      %110 = vmatpush2.msra.mxu0 0.0
      %111 = vmatprep.subr.mxu0 0.0
      %112 = vmatpush2.msra.mxu0 0.0
      %113 = vmatprep.subr.mxu0 0.0
      %114 = vmatpush2.msra.mxu0 0.0
      %115 = vmatprep.subr.mxu0 0.0
      %116 = vmatpush2.msra.mxu0 0.0
      %117 = vmatprep.subr.mxu0 0.0
      %118 = vmatpush2.msra.mxu0 0.0
      %119 = vmatprep.subr.mxu0 0.0
      %120 = vmatpush2.msra.mxu0 0.0
      %121 = vmatprep.subr.mxu0 0.0
      %122 = vmatpush2.msra.mxu0 0.0
      %123 = vmatprep.subr.mxu0 0.0
      %124 = vmatpush2.msra.mxu0 0.0
      %125 = vmatprep.subr.mxu0 0.0
      %126 = vmatpush2.msra.mxu0 0.0
      %127 = vmatprep.subr.mxu0 0.0
      %128 = vmatpush2.msra.mxu0 0.0
      %129 = vmatprep.subr.mxu0 0.0
      %130 = vmatpush2.msra.mxu0 0.0
      %131 = vmatprep.subr.mxu0 0.0
      %132 = vmatpush2.msra.mxu0 0.0
      %133 = vmatprep.subr.mxu0 0.0
      %134 = vmatpush2.msra.mxu0 0.0
      %135 = vmatprep.subr.mxu0 0.0
      %136 = vmatpush2.msra.mxu0 0.0
      %137 = vmatprep.subr.mxu0 0.0
      %138 = vmatpush2.msra.mxu0 0.0
      %139 = vmatprep.subr.mxu0 0.0
      %140 = vmatpush2.msra.mxu0 0.0
      %141 = vmatprep.mubr.f32.mxu0 0.0
      %142 = vmatmul.mubr.f32.gmra.mxu0 %v75
      %v143 = vpop.f32.mrf.mxu0
      %v144 = vadd.f32 0.0, %v143
      %v145 = vpop.f32.mrf.mxu0
      %146 = vdwg.mxu0
      %vm147 = vcmask 1040384
      %v148 = vsel %vm147, %v144, 0.0
      %149 = vadd.xlane.f32.xlu0 %v148
      %v150 = vpop.xlane.xlu0 %149
      %v151 = vrot.slane %v150, 4
      %v152 = vadd.f32 %v150, %v151
      %v153 = vrot.slane %v152, 2
      %v154 = vadd.f32 %v152, %v153
      %v155 = vrot.slane %v154, 1
      %v156 = vadd.f32 %v154, %v155
      %s157 = vtos %v156
      %v158 = vstv %s61
      %vm159 = vcmp.le.s32.totalorder %v62, %v158
      %vm160 = vcmp.le.s32.totalorder %v63, %v158
      %v161 = vsel %vm159, 1, 0
      %v162 = vsel %vm160, 1, 0
      %v163 = vcvt.s32.f32 %v161
      %v164 = vcvt.s32.f32 %v162
      %165 = vmatprep.subr.mxu0 0.0
      %166 = vmatpush1.msra.mxu0 0.0
      %167 = vmatprep.subr.mxu0 0.0
      %168 = vmatpush1.msra.mxu0 0.0
      %169 = vmatprep.subr.mxu0 0.0
      %170 = vmatpush1.msra.mxu0 0.0
      %171 = vmatprep.subr.mxu0 0.0
      %172 = vmatpush1.msra.mxu0 0.0
      %173 = vmatprep.subr.mxu0 0.0
      %174 = vmatpush1.msra.mxu0 0.0
      %175 = vmatprep.subr.mxu0 0.0
      %176 = vmatpush1.msra.mxu0 0.0
      %177 = vmatprep.subr.mxu0 0.0
      %178 = vmatpush1.msra.mxu0 0.0
      %179 = vmatprep.subr.mxu0 0.0
      %180 = vmatpush1.msra.mxu0 0.0
      %181 = vmatprep.subr.mxu0 0.0
      %182 = vmatpush1.msra.mxu0 0.0
      %183 = vmatprep.subr.mxu0 0.0
      %184 = vmatpush1.msra.mxu0 0.0
      %185 = vmatprep.subr.mxu0 0.0
      %186 = vmatpush1.msra.mxu0 0.0
      %187 = vmatprep.subr.mxu0 0.0
      %188 = vmatpush1.msra.mxu0 0.0
      %189 = vmatprep.subr.mxu0 0.0
      %190 = vmatpush1.msra.mxu0 0.0
      %191 = vmatprep.subr.mxu0 0.0
      %192 = vmatpush1.msra.mxu0 0.0
      %193 = vmatprep.subr.mxu0 0.0
      %194 = vmatpush1.msra.mxu0 %v164
      %195 = vmatprep.subr.mxu0 0.0
      %196 = vmatpush1.msra.mxu0 %v163
      %197 = vmatprep.subr.mxu0 0.0
      %198 = vmatpush2.msra.mxu0 0.0
      %199 = vmatprep.subr.mxu0 0.0
      %200 = vmatpush2.msra.mxu0 0.0
      %201 = vmatprep.subr.mxu0 0.0
      %202 = vmatpush2.msra.mxu0 0.0
      %203 = vmatprep.subr.mxu0 0.0
      %204 = vmatpush2.msra.mxu0 0.0
      %205 = vmatprep.subr.mxu0 0.0
      %206 = vmatpush2.msra.mxu0 0.0
      %207 = vmatprep.subr.mxu0 0.0
      %208 = vmatpush2.msra.mxu0 0.0
      %209 = vmatprep.subr.mxu0 0.0
      %210 = vmatpush2.msra.mxu0 0.0
      %211 = vmatprep.subr.mxu0 0.0
      %212 = vmatpush2.msra.mxu0 0.0
      %213 = vmatprep.subr.mxu0 0.0
      %214 = vmatpush2.msra.mxu0 0.0
      %215 = vmatprep.subr.mxu0 0.0
      %216 = vmatpush2.msra.mxu0 0.0
      %217 = vmatprep.subr.mxu0 0.0
      %218 = vmatpush2.msra.mxu0 0.0
      %219 = vmatprep.subr.mxu0 0.0
      %220 = vmatpush2.msra.mxu0 0.0
      %221 = vmatprep.subr.mxu0 0.0
      %222 = vmatpush2.msra.mxu0 0.0
      %223 = vmatprep.subr.mxu0 0.0
      %224 = vmatpush2.msra.mxu0 0.0
      %225 = vmatprep.subr.mxu0 0.0
      %226 = vmatpush2.msra.mxu0 0.0
      %227 = vmatprep.subr.mxu0 0.0
      %228 = vmatpush2.msra.mxu0 0.0
      %229 = vmatprep.mubr.f32.mxu0 0.0
      %230 = vmatmul.mubr.f32.gmra.mxu0 %v75
      %v231 = vpop.f32.mrf.mxu0
      %v232 = vadd.f32 0.0, %v231
      %v233 = vpop.f32.mrf.mxu0
      %234 = vdwg.mxu0
      %v235 = vsel %vm147, %v232, 0.0
      %236 = vadd.xlane.f32.xlu0 %v235
      %v237 = vpop.xlane.xlu0 %236
      %v238 = vrot.slane %v237, 4
      %v239 = vadd.f32 %v237, %v238
      %v240 = vrot.slane %v239, 2
      %v241 = vadd.f32 %v239, %v240
      %v242 = vrot.slane %v241, 1
      %v243 = vadd.f32 %v241, %v242
      %s244 = vtos %v243
      %p245 = scmp.ge.f32.partialorder %s157, 512.0
      %p246 = scmp.ge.f32.partialorder %s244, 1536.0
      %s247 = sadd.s32 %s58, 1
      %s248 = scalar_select %p245, %s52, %s247
      %s249 = scalar_select %p245, %s58, %s53
      %s250 = sadd.s32 %s61, 1
      %s251 = scalar_select %p246, %s54, %s250
      %s252 = scalar_select %p246, %s61, %s55
    $region14: #{tpu_custom_call.1} parent=1 // loop_footer
      %s51 = sadd.s32 1, %s47
    $region15: #{tpu_custom_call.1} parent=1 // loop_footer_branch
      %46 = sbr.rel target = $region11
    $region16: #{tpu_custom_call.1} parent=1 // loop_exit
      _
    %v253 = vld [vmem:[#allocation2] sm:$0xff]
    %v254 = vld [vmem:[#allocation2 + $0x8] sm:$0xff]
    %v257 = vstv %s52
    %vm258 = vcmp.le.s32.totalorder %v253, %v257
    %vm259 = vcmp.le.s32.totalorder %v254, %v257
    %v260 = vsel %vm258, %v253, -inf
    %v261 = vsel %vm259, %v254, -inf
    %v262 = vmax.f32 %v260, %v261
    %263 = vmax.xlane.f32.xlu0 %v262
    %v264 = vpop.xlane.xlu0 %263
    %v265 = vrot.slane %v264, 4
    %v266 = vmax.f32 %v264, %v265
    %v267 = vrot.slane %v266, 2
    %v268 = vmax.f32 %v266, %v267
    %v269 = vrot.slane %v268, 1
    %v270 = vmax.f32 %v268, %v269
    %s271 = vtos %v270
    %v272 = vsel %vm258, 1, 0
    %v273 = vsel %vm259, 1, 0
    %v274 = vcvt.s32.f32 %v272
    %v275 = vcvt.s32.f32 %v273
    %vm276 = vcmask 130048
    %v278 = vsel %vm276, 1.0, 0
    %280 = vmatprep.subr.mxu0 0.0
    %281 = vmatpush1.msra.mxu0 0.0
    %282 = vmatprep.subr.mxu0 0.0
    %283 = vmatpush1.msra.mxu0 0.0
    %284 = vmatprep.subr.mxu0 0.0
    %285 = vmatpush1.msra.mxu0 0.0
    %286 = vmatprep.subr.mxu0 0.0
    %287 = vmatpush1.msra.mxu0 0.0
    %288 = vmatprep.subr.mxu0 0.0
    %289 = vmatpush1.msra.mxu0 0.0
    %290 = vmatprep.subr.mxu0 0.0
    %291 = vmatpush1.msra.mxu0 0.0
    %292 = vmatprep.subr.mxu0 0.0
    %293 = vmatpush1.msra.mxu0 0.0
    %294 = vmatprep.subr.mxu0 0.0
    %295 = vmatpush1.msra.mxu0 0.0
    %296 = vmatprep.subr.mxu0 0.0
    %297 = vmatpush1.msra.mxu0 0.0
    %298 = vmatprep.subr.mxu0 0.0
    %299 = vmatpush1.msra.mxu0 0.0
    %300 = vmatprep.subr.mxu0 0.0
    %301 = vmatpush1.msra.mxu0 0.0
    %302 = vmatprep.subr.mxu0 0.0
    %303 = vmatpush1.msra.mxu0 0.0
    %304 = vmatprep.subr.mxu0 0.0
    %305 = vmatpush1.msra.mxu0 0.0
    %306 = vmatprep.subr.mxu0 0.0
    %307 = vmatpush1.msra.mxu0 0.0
    %308 = vmatprep.subr.mxu0 0.0
    %309 = vmatpush1.msra.mxu0 %v275
    %310 = vmatprep.subr.mxu0 0.0
    %311 = vmatpush1.msra.mxu0 %v274
    %312 = vmatprep.subr.mxu0 0.0
    %313 = vmatpush2.msra.mxu0 0.0
    %314 = vmatprep.subr.mxu0 0.0
    %315 = vmatpush2.msra.mxu0 0.0
    %316 = vmatprep.subr.mxu0 0.0
    %317 = vmatpush2.msra.mxu0 0.0
    %318 = vmatprep.subr.mxu0 0.0
    %319 = vmatpush2.msra.mxu0 0.0
    %320 = vmatprep.subr.mxu0 0.0
    %321 = vmatpush2.msra.mxu0 0.0
    %322 = vmatprep.subr.mxu0 0.0
    %323 = vmatpush2.msra.mxu0 0.0
    %324 = vmatprep.subr.mxu0 0.0
    %325 = vmatpush2.msra.mxu0 0.0
    %326 = vmatprep.subr.mxu0 0.0
    %327 = vmatpush2.msra.mxu0 0.0
    %328 = vmatprep.subr.mxu0 0.0
    %329 = vmatpush2.msra.mxu0 0.0
    %330 = vmatprep.subr.mxu0 0.0
    %331 = vmatpush2.msra.mxu0 0.0
    %332 = vmatprep.subr.mxu0 0.0
    %333 = vmatpush2.msra.mxu0 0.0
    %334 = vmatprep.subr.mxu0 0.0
    %335 = vmatpush2.msra.mxu0 0.0
    %336 = vmatprep.subr.mxu0 0.0
    %337 = vmatpush2.msra.mxu0 0.0
    %338 = vmatprep.subr.mxu0 0.0
    %339 = vmatpush2.msra.mxu0 0.0
    %340 = vmatprep.subr.mxu0 0.0
    %341 = vmatpush2.msra.mxu0 0.0
    %342 = vmatprep.subr.mxu0 0.0
    %343 = vmatpush2.msra.mxu0 0.0
    %344 = vmatprep.mubr.f32.mxu0 0.0
    %345 = vmatmul.mubr.f32.gmra.mxu0 %v278
    %v346 = vpop.f32.mrf.mxu0
    %v347 = vadd.f32 0.0, %v346
    %v348 = vpop.f32.mrf.mxu0
    %349 = vdwg.mxu0
    %vm350 = vcmask 1040384
    %v351 = vsel %vm350, %v347, 0.0
    %352 = vadd.xlane.f32.xlu0 %v351
    %v353 = vpop.xlane.xlu0 %352
    %v354 = vrot.slane %v353, 4
    %v355 = vadd.f32 %v353, %v354
    %v356 = vrot.slane %v355, 2
    %v357 = vadd.f32 %v355, %v356
    %v358 = vrot.slane %v357, 1
    %v359 = vadd.f32 %v357, %v358
    %s360 = vtos %v359
    %v361 = vsel %vm258, inf, %v253
    %v362 = vsel %vm259, inf, %v254
    %v363 = vmin.f32 %v361, %v362
    %364 = vmin.xlane.f32.xlu0 %v363
    %v365 = vpop.xlane.xlu0 %364
    %v366 = vrot.slane %v365, 4
    %v367 = vmin.f32 %v365, %v366
    %v368 = vrot.slane %v367, 2
    %v369 = vmin.f32 %v367, %v368
    %v370 = vrot.slane %v369, 1
    %v371 = vmin.f32 %v369, %v370
    %s372 = vtos %v371
    %p373 = scmp.ge.f32.partialorder %s360, 513.0
    %s374 = scalar_select %p373, %s271, %s372
    %s375 = ssub.f32 %s374, %s271
    %s376 = smul.f32 %s375, 0.75
    %s377 = sadd.f32 %s271, %s376
    %v378 = vstv %s54
    %vm379 = vcmp.le.s32.totalorder %v253, %v378
    %vm380 = vcmp.le.s32.totalorder %v254, %v378
    %v381 = vsel %vm379, %v253, -inf
    %v382 = vsel %vm380, %v254, -inf
    %v383 = vmax.f32 %v381, %v382
    %384 = vmax.xlane.f32.xlu0 %v383
    %v385 = vpop.xlane.xlu0 %384
    %v386 = vrot.slane %v385, 4
    %v387 = vmax.f32 %v385, %v386
    %v388 = vrot.slane %v387, 2
    %v389 = vmax.f32 %v387, %v388
    %v390 = vrot.slane %v389, 1
    %v391 = vmax.f32 %v389, %v390
    %s392 = vtos %v391
    %v393 = vsel %vm379, 1, 0
    %v394 = vsel %vm380, 1, 0
    %v395 = vcvt.s32.f32 %v393
    %v396 = vcvt.s32.f32 %v394
    %397 = vmatprep.subr.mxu0 0.0
    %398 = vmatpush1.msra.mxu0 0.0
    %399 = vmatprep.subr.mxu0 0.0
    %400 = vmatpush1.msra.mxu0 0.0
    %401 = vmatprep.subr.mxu0 0.0
    %402 = vmatpush1.msra.mxu0 0.0
    %403 = vmatprep.subr.mxu0 0.0
    %404 = vmatpush1.msra.mxu0 0.0
    %405 = vmatprep.subr.mxu0 0.0
    %406 = vmatpush1.msra.mxu0 0.0
    %407 = vmatprep.subr.mxu0 0.0
    %408 = vmatpush1.msra.mxu0 0.0
    %409 = vmatprep.subr.mxu0 0.0
    %410 = vmatpush1.msra.mxu0 0.0
    %411 = vmatprep.subr.mxu0 0.0
    %412 = vmatpush1.msra.mxu0 0.0
    %413 = vmatprep.subr.mxu0 0.0
    %414 = vmatpush1.msra.mxu0 0.0
    %415 = vmatprep.subr.mxu0 0.0
    %416 = vmatpush1.msra.mxu0 0.0
    %417 = vmatprep.subr.mxu0 0.0
    %418 = vmatpush1.msra.mxu0 0.0
    %419 = vmatprep.subr.mxu0 0.0
    %420 = vmatpush1.msra.mxu0 0.0
    %421 = vmatprep.subr.mxu0 0.0
    %422 = vmatpush1.msra.mxu0 0.0
    %423 = vmatprep.subr.mxu0 0.0
    %424 = vmatpush1.msra.mxu0 0.0
    %425 = vmatprep.subr.mxu0 0.0
    %426 = vmatpush1.msra.mxu0 %v396
    %427 = vmatprep.subr.mxu0 0.0
    %428 = vmatpush1.msra.mxu0 %v395
    %429 = vmatprep.subr.mxu0 0.0
    %430 = vmatpush2.msra.mxu0 0.0
    %431 = vmatprep.subr.mxu0 0.0
    %432 = vmatpush2.msra.mxu0 0.0
    %433 = vmatprep.subr.mxu0 0.0
    %434 = vmatpush2.msra.mxu0 0.0
    %435 = vmatprep.subr.mxu0 0.0
    %436 = vmatpush2.msra.mxu0 0.0
    %437 = vmatprep.subr.mxu0 0.0
    %438 = vmatpush2.msra.mxu0 0.0
    %439 = vmatprep.subr.mxu0 0.0
    %440 = vmatpush2.msra.mxu0 0.0
    %441 = vmatprep.subr.mxu0 0.0
    %442 = vmatpush2.msra.mxu0 0.0
    %443 = vmatprep.subr.mxu0 0.0
    %444 = vmatpush2.msra.mxu0 0.0
    %445 = vmatprep.subr.mxu0 0.0
    %446 = vmatpush2.msra.mxu0 0.0
    %447 = vmatprep.subr.mxu0 0.0
    %448 = vmatpush2.msra.mxu0 0.0
    %449 = vmatprep.subr.mxu0 0.0
    %450 = vmatpush2.msra.mxu0 0.0
    %451 = vmatprep.subr.mxu0 0.0
    %452 = vmatpush2.msra.mxu0 0.0
    %453 = vmatprep.subr.mxu0 0.0
    %454 = vmatpush2.msra.mxu0 0.0
    %455 = vmatprep.subr.mxu0 0.0
    %456 = vmatpush2.msra.mxu0 0.0
    %457 = vmatprep.subr.mxu0 0.0
    %458 = vmatpush2.msra.mxu0 0.0
    %459 = vmatprep.subr.mxu0 0.0
    %460 = vmatpush2.msra.mxu0 0.0
    %461 = vmatprep.mubr.f32.mxu0 0.0
    %462 = vmatmul.mubr.f32.gmra.mxu0 %v278
    %v463 = vpop.f32.mrf.mxu0
    %v464 = vadd.f32 0.0, %v463
    %v465 = vpop.f32.mrf.mxu0
    %466 = vdwg.mxu0
    %v467 = vsel %vm350, %v464, 0.0
    %468 = vadd.xlane.f32.xlu0 %v467
    %v469 = vpop.xlane.xlu0 %468
    %v470 = vrot.slane %v469, 4
    %v471 = vadd.f32 %v469, %v470
    %v472 = vrot.slane %v471, 2
    %v473 = vadd.f32 %v471, %v472
    %v474 = vrot.slane %v473, 1
    %v475 = vadd.f32 %v473, %v474
    %s476 = vtos %v475
    %v477 = vsel %vm379, inf, %v253
    %v478 = vsel %vm380, inf, %v254
    %v479 = vmin.f32 %v477, %v478
    %480 = vmin.xlane.f32.xlu0 %v479
    %v481 = vpop.xlane.xlu0 %480
    %v482 = vrot.slane %v481, 4
    %v483 = vmin.f32 %v481, %v482
    %v484 = vrot.slane %v483, 2
    %v485 = vmin.f32 %v483, %v484
    %v486 = vrot.slane %v485, 1
    %v487 = vmin.f32 %v485, %v486
    %s488 = vtos %v487
    %p489 = scmp.ge.f32.partialorder %s476, 1537.0
    %s490 = scalar_select %p489, %s392, %s488
    %s491 = ssub.f32 %s490, %s392
    %s492 = smul.f32 %s491, 0.25
    %s493 = sadd.f32 %s392, %s492
    %s494 = smul.f32 %s377, -1.5
    %s495 = smul.f32 %s493, 2.5
    %s496 = sadd.f32 %s494, %s495
    %v497 = vstv %s496
    %vm498 = vcmp.lt.f32.partialorder %v253, %v497
    %vm499 = vcmp.lt.f32.partialorder %v254, %v497
    %v500 = vsel %vm498, %v253, 0.0
    %v501 = vsel %vm499, %v254, 0.0
    %v502 = vadd.f32 %v500, %v501
    %503 = vadd.xlane.f32.xlu0 %v502
    %v504 = vpop.xlane.xlu0 %503
    %v505 = vrot.slane %v504, 4
    %v506 = vadd.f32 %v504, %v505
    %v507 = vrot.slane %v506, 2
    %v508 = vadd.f32 %v506, %v507
    %v509 = vrot.slane %v508, 1
    %v510 = vadd.f32 %v508, %v509
    %s511 = vtos %v510
    %v512 = vsel %vm498, 1, 0
    %v513 = vsel %vm499, 1, 0
    %v514 = vcvt.s32.f32 %v512
    %v515 = vcvt.s32.f32 %v513
    %516 = vmatprep.subr.mxu0 0.0
    %517 = vmatpush1.msra.mxu0 0.0
    %518 = vmatprep.subr.mxu0 0.0
    %519 = vmatpush1.msra.mxu0 0.0
    %520 = vmatprep.subr.mxu0 0.0
    %521 = vmatpush1.msra.mxu0 0.0
    %522 = vmatprep.subr.mxu0 0.0
    %523 = vmatpush1.msra.mxu0 0.0
    %524 = vmatprep.subr.mxu0 0.0
    %525 = vmatpush1.msra.mxu0 0.0
    %526 = vmatprep.subr.mxu0 0.0
    %527 = vmatpush1.msra.mxu0 0.0
    %528 = vmatprep.subr.mxu0 0.0
    %529 = vmatpush1.msra.mxu0 0.0
    %530 = vmatprep.subr.mxu0 0.0
    %531 = vmatpush1.msra.mxu0 0.0
    %532 = vmatprep.subr.mxu0 0.0
    %533 = vmatpush1.msra.mxu0 0.0
    %534 = vmatprep.subr.mxu0 0.0
    %535 = vmatpush1.msra.mxu0 0.0
    %536 = vmatprep.subr.mxu0 0.0
    %537 = vmatpush1.msra.mxu0 0.0
    %538 = vmatprep.subr.mxu0 0.0
    %539 = vmatpush1.msra.mxu0 0.0
    %540 = vmatprep.subr.mxu0 0.0
    %541 = vmatpush1.msra.mxu0 0.0
    %542 = vmatprep.subr.mxu0 0.0
    %543 = vmatpush1.msra.mxu0 0.0
    %544 = vmatprep.subr.mxu0 0.0
    %545 = vmatpush1.msra.mxu0 %v515
    %546 = vmatprep.subr.mxu0 0.0
    %547 = vmatpush1.msra.mxu0 %v514
    %548 = vmatprep.subr.mxu0 0.0
    %549 = vmatpush2.msra.mxu0 0.0
    %550 = vmatprep.subr.mxu0 0.0
    %551 = vmatpush2.msra.mxu0 0.0
    %552 = vmatprep.subr.mxu0 0.0
    %553 = vmatpush2.msra.mxu0 0.0
    %554 = vmatprep.subr.mxu0 0.0
    %555 = vmatpush2.msra.mxu0 0.0
    %556 = vmatprep.subr.mxu0 0.0
    %557 = vmatpush2.msra.mxu0 0.0
    %558 = vmatprep.subr.mxu0 0.0
    %559 = vmatpush2.msra.mxu0 0.0
    %560 = vmatprep.subr.mxu0 0.0
    %561 = vmatpush2.msra.mxu0 0.0
    %562 = vmatprep.subr.mxu0 0.0
    %563 = vmatpush2.msra.mxu0 0.0
    %564 = vmatprep.subr.mxu0 0.0
    %565 = vmatpush2.msra.mxu0 0.0
    %566 = vmatprep.subr.mxu0 0.0
    %567 = vmatpush2.msra.mxu0 0.0
    %568 = vmatprep.subr.mxu0 0.0
    %569 = vmatpush2.msra.mxu0 0.0
    %570 = vmatprep.subr.mxu0 0.0
    %571 = vmatpush2.msra.mxu0 0.0
    %572 = vmatprep.subr.mxu0 0.0
    %573 = vmatpush2.msra.mxu0 0.0
    %574 = vmatprep.subr.mxu0 0.0
    %575 = vmatpush2.msra.mxu0 0.0
    %576 = vmatprep.subr.mxu0 0.0
    %577 = vmatpush2.msra.mxu0 0.0
    %578 = vmatprep.subr.mxu0 0.0
    %579 = vmatpush2.msra.mxu0 0.0
    %580 = vmatprep.mubr.f32.mxu0 0.0
    %581 = vmatmul.mubr.f32.gmra.mxu0 %v278
    %v582 = vpop.f32.mrf.mxu0
    %v583 = vadd.f32 0.0, %v582
    %v584 = vpop.f32.mrf.mxu0
    %585 = vdwg.mxu0
    %v586 = vsel %vm350, %v583, 0.0
    %587 = vadd.xlane.f32.xlu0 %v586
    %v588 = vpop.xlane.xlu0 %587
    %v589 = vrot.slane %v588, 4
    %v590 = vadd.f32 %v588, %v589
    %v591 = vrot.slane %v590, 2
    %v592 = vadd.f32 %v590, %v591
    %v593 = vrot.slane %v592, 1
    %v594 = vadd.f32 %v592, %v593
    %s595 = vtos %v594
    %v596 = vstv %s595
    %v597 = vrcp.pop %v596
    %s598 = vtos %v597
    %s599 = smul.f32 %s511, %s598
    %v600 = vstv %s599
    %vm601 = vcmask 0
    %602 = vst.msk [vmem:[#allocation6] sm:$0x1] %vm601, %v600
    // Predicated region
    $region17: #{tpu_custom_call.1} parent=1 // pred_check
      _
    $region18: #{tpu_custom_call.1} parent=1 // pred_check_branch
      %604 = sbr.rel (0) target = $region20
    $region19: #{tpu_custom_call.1} parent=1 // pred_region
      %s606 = ssub.s32 16, 16
      %607 = vsyncadd [#allocation7], %s606
      %s609 = sshll.u32 [#allocation6], 4
      %s610 = int_to_ptr.vmem [resolvable:$true] %s609
      %612 = dma.vmem_to_hbm [thread:$0]  %s610, 16, %s2, [#allocation7]
    $region20: #{tpu_custom_call.1} parent=1 // pred_fallthru
      _
    // Predicated region
    $region21: #{tpu_custom_call.1} parent=1 // pred_check
      _
    $region22: #{tpu_custom_call.1} parent=1 // pred_check_branch
      %614 = sbr.rel (0) target = $region24
    $region23: #{tpu_custom_call.1} parent=1 // pred_region
      %615 = dma.done [#allocation7], 16
    $region24: #{tpu_custom_call.1} parent=1 // pred_fallthru
      _
    %616 = vsyncpa [#allocation7], 1
  %617 = vsyncmov [#allocation5]
  %s618 = vpop.sfrf %617
  %p619 = scmp.eq.s32.totalorder %s618, 0
  %p620 = pneg %p619
  %622 = shalt.err (%p620)
  %s623 = scalar_lea.sflag [#allocation5], 1
  %624 = vsyncmov %s623
  %s625 = vpop.sfrf %624
  %p626 = scmp.eq.s32.totalorder %s625, 0
  %p627 = pneg %p626
  %629 = shalt.err (%p627)
  %s630 = scalar_lea.sflag [#allocation5], 2
  %631 = vsyncmov %s630
  %s632 = vpop.sfrf %631
  %p633 = scmp.eq.s32.totalorder %s632, 0
  %p634 = pneg %p633
  %636 = shalt.err (%p634)
  %s637 = scalar_lea.sflag [#allocation5], 3
  %638 = vsyncmov %s637
  %s639 = vpop.sfrf %638
  %p640 = scmp.eq.s32.totalorder %s639, 0
  %p641 = pneg %p640
  %643 = shalt.err (%p641)

</llo_original>
